<compile_context>
chip_gen: v5e
topology: v5e:2x2
jax: 0.10.0
libtpu: 0.0.40
codegen_flags: <defaults>
</compile_context>

<pallas_src>
import jax
import jax.numpy as jnp
from jax import lax
from jax.experimental import pallas as pl
from jax.experimental.pallas import tpu as pltpu

BLOCK_SIZE = 8        # max sequence length (tril buffer size)
N_EMBED = 384
HEAD_SIZE = 64


def head_kernel(x_ref, wqkv_ref, o_ref):
    # x_ref: (Bblk, T, C)   wqkv_ref: (C, 3H) packed [Wq | Wk | Wv]   o_ref: (Bblk, T, H)
    Bblk, T, C = x_ref.shape
    H = o_ref.shape[-1]

    # Fused QKV projection: fold batch into the MXU row dimension.
    # (leading-dim merge: last dim (384) and sublane dim stay 8/128-aligned -> no relayout)
    x2d = x_ref[...].reshape(Bblk * T, C)                               # (Bblk*T, C)
    qkv = jnp.dot(x2d, wqkv_ref[...],
                  preferred_element_type=jnp.float32)                  # (Bblk*T, 3H)

    q = qkv[:, 0 * H:1 * H].reshape(Bblk, T, H)
    k = qkv[:, 1 * H:2 * H].reshape(Bblk, T, H)
    v = qkv[:, 2 * H:3 * H].reshape(Bblk, T, H)

    scale = jnp.float32(C) ** jnp.float32(-0.5)   # C**-0.5 (n_embed), as in the PyTorch code

    # Batched scores (jnp.dot is not batched; einsum lowers to MXU matmuls).
    wei = jnp.einsum('btd,bsd->bts', q, k,
                     preferred_element_type=jnp.float32) * scale        # (Bblk, T, T)

    # Causal mask: tril[:T, :T] == 0 -> -inf.  Built once at (T, T), broadcast over batch.
    row = lax.broadcasted_iota(jnp.int32, (T, T), 0)
    col = lax.broadcasted_iota(jnp.int32, (T, T), 1)
    causal = (col <= row)[None, :, :]                                    # (1, T, T)
    wei = jnp.where(causal, wei, jnp.float32(-jnp.inf))

    # Softmax over last axis, all in fp32.
    wei = wei - jnp.max(wei, axis=-1, keepdims=True)
    wei = jnp.exp(wei)
    wei = wei / jnp.sum(wei, axis=-1, keepdims=True)

    out = jnp.einsum('bts,bsd->btd', wei, v,
                     preferred_element_type=jnp.float32)                 # (Bblk, T, H)
    # TODO(synk): H=64 output lanes -> masked partial stores; negligible at this size.
    o_ref[...] = out.astype(o_ref.dtype)


def head_forward(x, wqkv, *, batch_block=None):
    """x: (B, T, C) float32; wqkv: (C, 3H) float32 packed [Wq|Wk|Wv] -> (B, T, H)."""
    B, T, C = x.shape
    H3 = wqkv.shape[1]
    H = H3 // 3
    if batch_block is None:
        batch_block = B          # single grid step at small B: whole (B*T, C) projection at once
    assert B % batch_block == 0
    grid = (B // batch_block,)
    return pl.pallas_call(
        head_kernel,
        out_shape=jax.ShapeDtypeStruct((B, T, H), x.dtype),
        grid_spec=pltpu.PrefetchScalarGridSpec(
            num_scalar_prefetch=0,
            grid=grid,
            in_specs=[
                pl.BlockSpec((batch_block, T, C), lambda b: (b, 0, 0)),
                # constant block index across the grid -> weights stay resident (no re-DMA)
                pl.BlockSpec((C, H3), lambda b: (0, 0)),
            ],
            out_specs=pl.BlockSpec((batch_block, T, H), lambda b: (b, 0, 0)),
        ),
        # "arbitrary": don't shard this tiny workload across v7x TensorCores,
        # which would duplicate the dominant ~290 KB weight fetch.
        compiler_params=pltpu.CompilerParams(
            dimension_semantics=("arbitrary",)),
    )(x, wqkv)


def reference_forward(x, wq, wk, wv):
    """Pure-JAX reference mirroring the PyTorch module."""
    B, T, C = x.shape
    k = x @ wk
    q = x @ wq
    v = x @ wv
    wei = (q @ jnp.swapaxes(k, -2, -1)) * (C ** -0.5)
    tril = jnp.tril(jnp.ones((BLOCK_SIZE, BLOCK_SIZE)))[:T, :T]
    wei = jnp.where(tril == 0, -jnp.inf, wei)
    wei = jax.nn.softmax(wei, axis=-1)
    return wei @ v


if __name__ == "__main__":
    key = jax.random.PRNGKey(0)
    kx, kk, kq, kv = jax.random.split(key, 4)

    B, T, C, H = 2, BLOCK_SIZE, N_EMBED, HEAD_SIZE

    x = jax.random.normal(kx, (B, T, C), dtype=jnp.float32)
    # deterministic "weights" (nn.Linear(n_embed, head_size, bias=False)),
    # stored as (C, H) i.e. transposed relative to PyTorch's (H, C)
    wk = jax.random.normal(kk, (C, H), dtype=jnp.float32) * 0.02
    wq = jax.random.normal(kq, (C, H), dtype=jnp.float32) * 0.02
    wv = jax.random.normal(kv, (C, H), dtype=jnp.float32) * 0.02

    # Pack [Wq | Wk | Wv] along the output dim -> (C, 3H)
    wqkv = jnp.concatenate([wq, wk, wv], axis=1)

    out = head_forward(x, wqkv)
    jax.block_until_ready(out)

    ref = reference_forward(x, wq, wk, wv)
    assert out.shape == (B, T, H)
    assert jnp.allclose(out, ref, atol=1e-5, rtol=1e-5), "mismatch vs reference"

    print("KERNEL_OK")
</pallas_src>

<mosaic_0001>
module attributes {stable_mosaic.version = 11 : i64} {
  func.func @head_kernel(%arg0: i32, %arg1: memref<2x8x384xf32, #tpu.memory_space<vmem>>, %arg2: memref<384x192xf32, #tpu.memory_space<vmem>>, %arg3: memref<2x8x64xf32, #tpu.memory_space<vmem>>) attributes {dimension_semantics = [#tpu.dimension_semantics<arbitrary>], iteration_bounds = array<i64: 1>, scalar_prefetch = 0 : i64, scratch_operands = 0 : i64, tpu.core_type = #tpu.core_type<tc>, window_params = [{transform_indices = @transform_0, window_bounds = array<i64: 2, 8, 384>}, {pipeline_mode = #tpu.pipeline_mode<synchronous>, transform_indices = @transform_1, window_bounds = array<i64: 384, 192>}, {transform_indices = @transform_2, window_bounds = array<i64: 2, 8, 64>}]} {
    %c0 = arith.constant 0 : index
    %c0_0 = arith.constant 0 : index
    %c0_1 = arith.constant 0 : index
    %0 = vector.load %arg1[%c0, %c0_0, %c0_1] : memref<2x8x384xf32, #tpu.memory_space<vmem>>, vector<2x8x384xf32>
    %1 = vector.shape_cast %0 : vector<2x8x384xf32> to vector<16x384xf32>
    %c0_2 = arith.constant 0 : index
    %c0_3 = arith.constant 0 : index
    %2 = vector.load %arg2[%c0_2, %c0_3] : memref<384x192xf32, #tpu.memory_space<vmem>>, vector<384x192xf32>
    %cst = arith.constant dense<0.000000e+00> : vector<16x192xf32>
    %3 = tpu.matmul %1, %2, %cst {dimension_numbers = #tpu.dot_dimension_numbers<[1], [0], [0], [1], [0, 0, 1, 1], [], []>} : vector<16x384xf32>, vector<384x192xf32>, vector<16x192xf32> -> vector<16x192xf32>
    %4 = vector.extract_strided_slice %3 {offsets = [0, 0], sizes = [16, 64], strides = [1, 1]} : vector<16x192xf32> to vector<16x64xf32>
    %5 = vector.shape_cast %4 : vector<16x64xf32> to vector<2x8x64xf32>
    %6 = vector.extract_strided_slice %3 {offsets = [0, 64], sizes = [16, 64], strides = [1, 1]} : vector<16x192xf32> to vector<16x64xf32>
    %7 = vector.shape_cast %6 : vector<16x64xf32> to vector<2x8x64xf32>
    %8 = vector.extract_strided_slice %3 {offsets = [0, 128], sizes = [16, 64], strides = [1, 1]} : vector<16x192xf32> to vector<16x64xf32>
    %9 = vector.shape_cast %8 : vector<16x64xf32> to vector<2x8x64xf32>
    %cst_4 = arith.constant 3.840000e+02 : f32
    %cst_5 = arith.constant -5.000000e-01 : f32
    %10 = math.powf %cst_4, %cst_5 : f32
    "tpu.trace_start"() <{level = 10 : i32, message = "btd,bsd->bts"}> : () -> ()
    %cst_6 = arith.constant dense<0.000000e+00> : vector<2x8x8xf32>
    %11 = tpu.matmul %5, %7, %cst_6 {dimension_numbers = #tpu.dot_dimension_numbers<[2], [2], [1], [1], [0, 0, 0, 1, 1, 1], [0], [0]>} : vector<2x8x64xf32>, vector<2x8x64xf32>, vector<2x8x8xf32> -> vector<2x8x8xf32>
    "tpu.trace_stop"() : () -> ()
    %12 = vector.broadcast %10 : f32 to vector<2x8x8xf32>
    %13 = arith.mulf %11, %12 : vector<2x8x8xf32>
    %14 = tpu.iota {dimensions = array<i32: 0>} : vector<8x8xi32>
    %15 = tpu.iota {dimensions = array<i32: 1>} : vector<8x8xi32>
    %16 = arith.cmpi sle, %15, %14 : vector<8x8xi32>
    %17 = vector.shape_cast %16 : vector<8x8xi1> to vector<1x8x8xi1>
    %cst_7 = arith.constant 0xFF800000 : f32
    %18 = vector.shape_cast %17 : vector<1x8x8xi1> to vector<1x8x8xi1>
    %19 = vector.broadcast %18 : vector<1x8x8xi1> to vector<2x8x8xi1>
    %20 = vector.broadcast %cst_7 : f32 to vector<2x8x8xf32>
    %21 = arith.select %19, %13, %20 : vector<2x8x8xi1>, vector<2x8x8xf32>
    %cst_8 = arith.constant dense<0xFF800000> : vector<2x8xf32>
    %22 = vector.multi_reduction <maximumf>, %21, %cst_8 [2] : vector<2x8x8xf32> to vector<2x8xf32>
    %23 = vector.shape_cast %22 : vector<2x8xf32> to vector<2x8x1xf32>
    %24 = vector.broadcast %23 : vector<2x8x1xf32> to vector<2x8x8xf32>
    %25 = arith.subf %21, %24 : vector<2x8x8xf32>
    %26 = math.exp %25 : vector<2x8x8xf32>
    %cst_9 = arith.constant dense<0.000000e+00> : vector<2x8xf32>
    %27 = vector.multi_reduction <add>, %26, %cst_9 [2] : vector<2x8x8xf32> to vector<2x8xf32>
    %28 = vector.shape_cast %27 : vector<2x8xf32> to vector<2x8x1xf32>
    %29 = vector.broadcast %28 : vector<2x8x1xf32> to vector<2x8x8xf32>
    %30 = arith.divf %26, %29 : vector<2x8x8xf32>
    "tpu.trace_start"() <{level = 10 : i32, message = "bts,bsd->btd"}> : () -> ()
    %cst_10 = arith.constant dense<0.000000e+00> : vector<2x8x64xf32>
    %31 = tpu.matmul %30, %9, %cst_10 {dimension_numbers = #tpu.dot_dimension_numbers<[2], [1], [1], [2], [0, 0, 0, 1, 1, 2], [0], [0]>} : vector<2x8x8xf32>, vector<2x8x64xf32>, vector<2x8x64xf32> -> vector<2x8x64xf32>
    "tpu.trace_stop"() : () -> ()
    %c0_11 = arith.constant 0 : index
    %c0_12 = arith.constant 0 : index
    %c0_13 = arith.constant 0 : index
    %32 = vector.load %arg3[%c0_11, %c0_12, %c0_13] : memref<2x8x64xf32, #tpu.memory_space<vmem>>, vector<2x8x64xf32>
    tpu.vector_store %arg3[%c0_11, %c0_12, %c0_13], %31 {strides = array<i32>} : memref<2x8x64xf32, #tpu.memory_space<vmem>>, vector<2x8x64xf32>,
    return
  }
  func.func @transform_0(%arg0: i32) -> (i32, i32, i32) {
    %c0_i32 = arith.constant 0 : i32
    %c0_i32_0 = arith.constant 0 : i32
    %c0_i32_1 = arith.constant 0 : i32
    return %arg0, %c0_i32, %c0_i32_0 : i32, i32, i32
  }
  func.func @transform_1(%arg0: i32) -> (i32, i32) {
    %c0_i32 = arith.constant 0 : i32
    %c0_i32_0 = arith.constant 0 : i32
    %c0_i32_1 = arith.constant 0 : i32
    return %c0_i32, %c0_i32_0 : i32, i32
  }
  func.func @transform_2(%arg0: i32) -> (i32, i32, i32) {
    %c0_i32 = arith.constant 0 : i32
    %c0_i32_0 = arith.constant 0 : i32
    %c0_i32_1 = arith.constant 0 : i32
    return %arg0, %c0_i32, %c0_i32_0 : i32, i32, i32
  }
}

</mosaic_0001>

<llo_original>
// kernel: tpu_custom_call.1
$region0: #{tpu_custom_call.1}
  #allocation0 [shape = 'u32[]', space=smem, size = 0x4, offset = 0x4, fixed_abs, tag = 'smem constant byte address 0x4 - core index']
  #allocation1 [shape = 'u32[72,128]{1,0:T(1,128)}', space=vmem, size = 0x9000, scoped, tag = 'internal scratch']
  %s0 = inlined_call_operand.vmem [shape: f32[2,8,384], index: 0, kind: input, shape index: {}]
  %s1 = inlined_call_operand.vmem [shape: f32[384,192], index: 1, kind: input, shape index: {}]
  %s2 = inlined_call_operand.hbm [shape: f32[2,8,64], index: 2, kind: output, shape index: {}]
  %s3 = sld [smem:[#allocation0]]
  $region18: #{tpu_custom_call.1} parent=0
    _
  %s5 = ssub.s32 1, %s3
  %s6 = scalar_select 0, %s5, %s3
  $region1: #{tpu_custom_call.1} parent=0
    #allocation2 [shape = 'u8[8192]{0}', space=vmem, size = 0x2000, scoped, tag = 'output window, operand 0, single buffered']
    #allocation3 [shape = 's32[1]{0}', space=sflag, size = 0x4, scoped, tag = 'scoped memory for tpu_custom_call.1']
    %7 = vsyncpa [#allocation3], 0
    // Predicated region
    $region2: #{tpu_custom_call.1} parent=1 // pred_check
      _
    $region3: #{tpu_custom_call.1} parent=1 // pred_check_branch
      %9 = sbr.rel (0) target = $region5
    $region4: #{tpu_custom_call.1} parent=1 // pred_region
      _
    $region5: #{tpu_custom_call.1} parent=1 // pred_fallthru
      _
    // Predicated region
    $region6: #{tpu_custom_call.1} parent=1 // pred_check
      _
    $region7: #{tpu_custom_call.1} parent=1 // pred_check_branch
      %11 = sbr.rel (0) target = $region9
    $region8: #{tpu_custom_call.1} parent=1 // pred_region
      _
    $region9: #{tpu_custom_call.1} parent=1 // pred_fallthru
      _
    %v12 = vld [vmem:[%s0] sm:$0xff]
    %v13 = vld [vmem:[%s0 + $0x8] sm:$0xff]
    %v14 = vld [vmem:[%s0 + $0x10] sm:$0xff]
    %v15 = vld [vmem:[%s0 + $0x18] sm:$0xff]
    %v16 = vld [vmem:[%s0 + $0x20] sm:$0xff]
    %v17 = vld [vmem:[%s0 + $0x28] sm:$0xff]
    %v18 = vld [vmem:[%s1] sm:$0xff]
    %v19 = vld [vmem:[%s1 + $0x8] sm:$0xff]
    %v20 = vld [vmem:[%s1 + $0x10] sm:$0xff]
    %v21 = vld [vmem:[%s1 + $0x18] sm:$0xff]
    %v22 = vld [vmem:[%s1 + $0x20] sm:$0xff]
    %v23 = vld [vmem:[%s1 + $0x28] sm:$0xff]
    %v24 = vld [vmem:[%s1 + $0x30] sm:$0xff]
    %v25 = vld [vmem:[%s1 + $0x38] sm:$0xff]
    %v26 = vld [vmem:[%s1 + $0x40] sm:$0xff]
    %v27 = vld [vmem:[%s1 + $0x48] sm:$0xff]
    %v28 = vld [vmem:[%s1 + $0x50] sm:$0xff]
    %v29 = vld [vmem:[%s1 + $0x58] sm:$0xff]
    %v30 = vld [vmem:[%s1 + $0x60] sm:$0xff]
    %v31 = vld [vmem:[%s1 + $0x68] sm:$0xff]
    %v32 = vld [vmem:[%s1 + $0x70] sm:$0xff]
    %v33 = vld [vmem:[%s1 + $0x78] sm:$0xff]
    %v34 = vld [vmem:[%s1 + $0x80] sm:$0xff]
    %v35 = vld [vmem:[%s1 + $0x88] sm:$0xff]
    %v36 = vld [vmem:[%s1 + $0x90] sm:$0xff]
    %v37 = vld [vmem:[%s1 + $0x98] sm:$0xff]
    %v38 = vld [vmem:[%s1 + $0xa0] sm:$0xff]
    %v39 = vld [vmem:[%s1 + $0xa8] sm:$0xff]
    %v40 = vld [vmem:[%s1 + $0xb0] sm:$0xff]
    %v41 = vld [vmem:[%s1 + $0xb8] sm:$0xff]
    %v42 = vld [vmem:[%s1 + $0xc0] sm:$0xff]
    %v43 = vld [vmem:[%s1 + $0xc8] sm:$0xff]
    %v44 = vld [vmem:[%s1 + $0xd0] sm:$0xff]
    %v45 = vld [vmem:[%s1 + $0xd8] sm:$0xff]
    %v46 = vld [vmem:[%s1 + $0xe0] sm:$0xff]
    %v47 = vld [vmem:[%s1 + $0xe8] sm:$0xff]
    %v48 = vld [vmem:[%s1 + $0xf0] sm:$0xff]
    %v49 = vld [vmem:[%s1 + $0xf8] sm:$0xff]
    %v50 = vld [vmem:[%s1 + $0x100] sm:$0xff]
    %v51 = vld [vmem:[%s1 + $0x108] sm:$0xff]
    %v52 = vld [vmem:[%s1 + $0x110] sm:$0xff]
    %v53 = vld [vmem:[%s1 + $0x118] sm:$0xff]
    %v54 = vld [vmem:[%s1 + $0x120] sm:$0xff]
    %v55 = vld [vmem:[%s1 + $0x128] sm:$0xff]
    %v56 = vld [vmem:[%s1 + $0x130] sm:$0xff]
    %v57 = vld [vmem:[%s1 + $0x138] sm:$0xff]
    %v58 = vld [vmem:[%s1 + $0x140] sm:$0xff]
    %v59 = vld [vmem:[%s1 + $0x148] sm:$0xff]
    %v60 = vld [vmem:[%s1 + $0x150] sm:$0xff]
    %v61 = vld [vmem:[%s1 + $0x158] sm:$0xff]
    %v62 = vld [vmem:[%s1 + $0x160] sm:$0xff]
    %v63 = vld [vmem:[%s1 + $0x168] sm:$0xff]
    %v64 = vld [vmem:[%s1 + $0x170] sm:$0xff]
    %v65 = vld [vmem:[%s1 + $0x178] sm:$0xff]
    %v66 = vld [vmem:[%s1 + $0x180] sm:$0xff]
    %v67 = vld [vmem:[%s1 + $0x188] sm:$0xff]
    %v68 = vld [vmem:[%s1 + $0x190] sm:$0xff]
    %v69 = vld [vmem:[%s1 + $0x198] sm:$0xff]
    %v70 = vld [vmem:[%s1 + $0x1a0] sm:$0xff]
    %v71 = vld [vmem:[%s1 + $0x1a8] sm:$0xff]
    %v72 = vld [vmem:[%s1 + $0x1b0] sm:$0xff]
    %v73 = vld [vmem:[%s1 + $0x1b8] sm:$0xff]
    %v74 = vld [vmem:[%s1 + $0x1c0] sm:$0xff]
    %v75 = vld [vmem:[%s1 + $0x1c8] sm:$0xff]
    %v76 = vld [vmem:[%s1 + $0x1d0] sm:$0xff]
    %v77 = vld [vmem:[%s1 + $0x1d8] sm:$0xff]
    %v78 = vld [vmem:[%s1 + $0x1e0] sm:$0xff]
    %v79 = vld [vmem:[%s1 + $0x1e8] sm:$0xff]
    %v80 = vld [vmem:[%s1 + $0x1f0] sm:$0xff]
    %v81 = vld [vmem:[%s1 + $0x1f8] sm:$0xff]
    %v82 = vld [vmem:[%s1 + $0x200] sm:$0xff]
    %v83 = vld [vmem:[%s1 + $0x208] sm:$0xff]
    %v84 = vld [vmem:[%s1 + $0x210] sm:$0xff]
    %v85 = vld [vmem:[%s1 + $0x218] sm:$0xff]
    %v86 = vld [vmem:[%s1 + $0x220] sm:$0xff]
    %v87 = vld [vmem:[%s1 + $0x228] sm:$0xff]
    %v88 = vld [vmem:[%s1 + $0x230] sm:$0xff]
    %v89 = vld [vmem:[%s1 + $0x238] sm:$0xff]
    %v90 = vld [vmem:[%s1 + $0x240] sm:$0xff]
    %v91 = vld [vmem:[%s1 + $0x248] sm:$0xff]
    %v92 = vld [vmem:[%s1 + $0x250] sm:$0xff]
    %v93 = vld [vmem:[%s1 + $0x258] sm:$0xff]
    %v94 = vld [vmem:[%s1 + $0x260] sm:$0xff]
    %v95 = vld [vmem:[%s1 + $0x268] sm:$0xff]
    %v96 = vld [vmem:[%s1 + $0x270] sm:$0xff]
    %v97 = vld [vmem:[%s1 + $0x278] sm:$0xff]
    %v98 = vld [vmem:[%s1 + $0x280] sm:$0xff]
    %v99 = vld [vmem:[%s1 + $0x288] sm:$0xff]
    %v100 = vld [vmem:[%s1 + $0x290] sm:$0xff]
    %v101 = vld [vmem:[%s1 + $0x298] sm:$0xff]
    %v102 = vld [vmem:[%s1 + $0x2a0] sm:$0xff]
    %v103 = vld [vmem:[%s1 + $0x2a8] sm:$0xff]
    %v104 = vld [vmem:[%s1 + $0x2b0] sm:$0xff]
    %v105 = vld [vmem:[%s1 + $0x2b8] sm:$0xff]
    %v106 = vld [vmem:[%s1 + $0x2c0] sm:$0xff]
    %v107 = vld [vmem:[%s1 + $0x2c8] sm:$0xff]
    %v108 = vld [vmem:[%s1 + $0x2d0] sm:$0xff]
    %v109 = vld [vmem:[%s1 + $0x2d8] sm:$0xff]
    %v110 = vld [vmem:[%s1 + $0x2e0] sm:$0xff]
    %v111 = vld [vmem:[%s1 + $0x2e8] sm:$0xff]
    %v112 = vld [vmem:[%s1 + $0x2f0] sm:$0xff]
    %v113 = vld [vmem:[%s1 + $0x2f8] sm:$0xff]
    %114 = vmatpush.msra.mxu0 %v48
    %115 = vmatpush.msra.mxu0 %v46
    %116 = vmatpush.msra.mxu0 %v44
    %117 = vmatpush.msra.mxu0 %v42
    %118 = vmatpush.msra.mxu0 %v40
    %119 = vmatpush.msra.mxu0 %v38
    %120 = vmatpush.msra.mxu0 %v36
    %121 = vmatpush.msra.mxu0 %v34
    %122 = vmatpush.msra.mxu0 %v32
    %123 = vmatpush.msra.mxu0 %v30
    %124 = vmatpush.msra.mxu0 %v28
    %125 = vmatpush.msra.mxu0 %v26
    %126 = vmatpush.msra.mxu0 %v24
    %127 = vmatpush.msra.mxu0 %v22
    %128 = vmatpush.msra.mxu0 %v20
    %129 = vmatpush.msra.mxu0 %v18
    %130 = vmatmul.f32.gmra.mxu0 %v12
    %v131 = vpop.f32.mrf.mxu0
    %v132 = vadd.f32 0.0, %v131
    %133 = vmatmul.f32.gmra.mxu0 %v15
    %v134 = vpop.f32.mrf.mxu0
    %v135 = vadd.f32 0.0, %v134
    %136 = vdwg.mxu0
    %137 = vmatpush.msra.mxu0 %v80
    %138 = vmatpush.msra.mxu0 %v78
    %139 = vmatpush.msra.mxu0 %v76
    %140 = vmatpush.msra.mxu0 %v74
    %141 = vmatpush.msra.mxu0 %v72
    %142 = vmatpush.msra.mxu0 %v70
    %143 = vmatpush.msra.mxu0 %v68
    %144 = vmatpush.msra.mxu0 %v66
    %145 = vmatpush.msra.mxu0 %v64
    %146 = vmatpush.msra.mxu0 %v62
    %147 = vmatpush.msra.mxu0 %v60
    %148 = vmatpush.msra.mxu0 %v58
    %149 = vmatpush.msra.mxu0 %v56
    %150 = vmatpush.msra.mxu0 %v54
    %151 = vmatpush.msra.mxu0 %v52
    %152 = vmatpush.msra.mxu0 %v50
    %153 = vmatmul.f32.gmra.mxu0 %v13
    %v154 = vpop.f32.mrf.mxu0
    %v155 = vadd.f32 %v132, %v154
    %156 = vmatmul.f32.gmra.mxu0 %v16
    %v157 = vpop.f32.mrf.mxu0
    %v158 = vadd.f32 %v135, %v157
    %159 = vdwg.mxu0
    %160 = vmatpush.msra.mxu0 %v112
    %161 = vmatpush.msra.mxu0 %v110
    %162 = vmatpush.msra.mxu0 %v108
    %163 = vmatpush.msra.mxu0 %v106
    %164 = vmatpush.msra.mxu0 %v104
    %165 = vmatpush.msra.mxu0 %v102
    %166 = vmatpush.msra.mxu0 %v100
    %167 = vmatpush.msra.mxu0 %v98
    %168 = vmatpush.msra.mxu0 %v96
    %169 = vmatpush.msra.mxu0 %v94
    %170 = vmatpush.msra.mxu0 %v92
    %171 = vmatpush.msra.mxu0 %v90
    %172 = vmatpush.msra.mxu0 %v88
    %173 = vmatpush.msra.mxu0 %v86
    %174 = vmatpush.msra.mxu0 %v84
    %175 = vmatpush.msra.mxu0 %v82
    %176 = vmatmul.f32.gmra.mxu0 %v14
    %v177 = vpop.f32.mrf.mxu0
    %v178 = vadd.f32 %v155, %v177
    %179 = vmatmul.f32.gmra.mxu0 %v17
    %v180 = vpop.f32.mrf.mxu0
    %v181 = vadd.f32 %v158, %v180
    %182 = vdwg.mxu0
    %183 = vmatpush.msra.mxu0 %v49
    %184 = vmatpush.msra.mxu0 %v47
    %185 = vmatpush.msra.mxu0 %v45
    %186 = vmatpush.msra.mxu0 %v43
    %187 = vmatpush.msra.mxu0 %v41
    %188 = vmatpush.msra.mxu0 %v39
    %189 = vmatpush.msra.mxu0 %v37
    %190 = vmatpush.msra.mxu0 %v35
    %191 = vmatpush.msra.mxu0 %v33
    %192 = vmatpush.msra.mxu0 %v31
    %193 = vmatpush.msra.mxu0 %v29
    %194 = vmatpush.msra.mxu0 %v27
    %195 = vmatpush.msra.mxu0 %v25
    %196 = vmatpush.msra.mxu0 %v23
    %197 = vmatpush.msra.mxu0 %v21
    %198 = vmatpush.msra.mxu0 %v19
    %199 = vmatmul.f32.gmra.mxu0 %v12
    %v200 = vpop.f32.mrf.mxu0
    %v201 = vadd.f32 0.0, %v200
    %202 = vmatmul.f32.gmra.mxu0 %v15
    %v203 = vpop.f32.mrf.mxu0
    %v204 = vadd.f32 0.0, %v203
    %205 = vdwg.mxu0
    %206 = vmatpush.msra.mxu0 %v81
    %207 = vmatpush.msra.mxu0 %v79
    %208 = vmatpush.msra.mxu0 %v77
    %209 = vmatpush.msra.mxu0 %v75
    %210 = vmatpush.msra.mxu0 %v73
    %211 = vmatpush.msra.mxu0 %v71
    %212 = vmatpush.msra.mxu0 %v69
    %213 = vmatpush.msra.mxu0 %v67
    %214 = vmatpush.msra.mxu0 %v65
    %215 = vmatpush.msra.mxu0 %v63
    %216 = vmatpush.msra.mxu0 %v61
    %217 = vmatpush.msra.mxu0 %v59
    %218 = vmatpush.msra.mxu0 %v57
    %219 = vmatpush.msra.mxu0 %v55
    %220 = vmatpush.msra.mxu0 %v53
    %221 = vmatpush.msra.mxu0 %v51
    %222 = vmatmul.f32.gmra.mxu0 %v13
    %v223 = vpop.f32.mrf.mxu0
    %v224 = vadd.f32 %v201, %v223
    %225 = vmatmul.f32.gmra.mxu0 %v16
    %v226 = vpop.f32.mrf.mxu0
    %v227 = vadd.f32 %v204, %v226
    %228 = vdwg.mxu0
    %229 = vmatpush.msra.mxu0 %v113
    %230 = vmatpush.msra.mxu0 %v111
    %231 = vmatpush.msra.mxu0 %v109
    %232 = vmatpush.msra.mxu0 %v107
    %233 = vmatpush.msra.mxu0 %v105
    %234 = vmatpush.msra.mxu0 %v103
    %235 = vmatpush.msra.mxu0 %v101
    %236 = vmatpush.msra.mxu0 %v99
    %237 = vmatpush.msra.mxu0 %v97
    %238 = vmatpush.msra.mxu0 %v95
    %239 = vmatpush.msra.mxu0 %v93
    %240 = vmatpush.msra.mxu0 %v91
    %241 = vmatpush.msra.mxu0 %v89
    %242 = vmatpush.msra.mxu0 %v87
    %243 = vmatpush.msra.mxu0 %v85
    %244 = vmatpush.msra.mxu0 %v83
    %245 = vmatmul.f32.gmra.mxu0 %v14
    %v246 = vpop.f32.mrf.mxu0
    %v247 = vadd.f32 %v224, %v246
    %248 = vmatmul.f32.gmra.mxu0 %v17
    %v249 = vpop.f32.mrf.mxu0
    %v250 = vadd.f32 %v227, %v249
    %251 = vdwg.mxu0
    %253 = vrot.lane.b32.xlu0 %v178, 64
    %v254 = vpop.permute.xlu0 %253
    %vm255 = vcmask 523264
    %v256 = vsel %vm255, %v178, 0
    %v258 = vsel %vm255, %v254, 0
    %260 = vmatpush.xpose.msra.mxu0 0.0
    %261 = vmatpush.xpose.msra.mxu0 0.0
    %262 = vmatpush.xpose.msra.mxu0 0.0
    %263 = vmatpush.xpose.msra.mxu0 0.0
    %264 = vmatpush.xpose.msra.mxu0 0.0
    %265 = vmatpush.xpose.msra.mxu0 0.0
    %266 = vmatpush.xpose.msra.mxu0 0.0
    %267 = vmatpush.xpose.msra.mxu0 0.0
    %268 = vmatpush.xpose.msra.mxu0 0.0
    %269 = vmatpush.xpose.msra.mxu0 0.0
    %270 = vmatpush.xpose.msra.mxu0 0.0
    %271 = vmatpush.xpose.msra.mxu0 0.0
    %272 = vmatpush.xpose.msra.mxu0 0.0
    %273 = vmatpush.xpose.msra.mxu0 0.0
    %274 = vmatpush.xpose.msra.mxu0 0.0
    %275 = vmatpush.xpose.msra.mxu0 %v258
    %276 = vmatmul.f32.gmra.mxu0 %v256
    %v277 = vpop.f32.mrf.mxu0
    %v278 = vadd.f32 0.0, %v277
    %279 = vdwg.mxu0
    %281 = vrot.lane.b32.xlu0 %v181, 64
    %v282 = vpop.permute.xlu0 %281
    %v283 = vsel %vm255, %v181, 0
    %v285 = vsel %vm255, %v282, 0
    %287 = vmatpush.xpose.msra.mxu0 0.0
    %288 = vmatpush.xpose.msra.mxu0 0.0
    %289 = vmatpush.xpose.msra.mxu0 0.0
    %290 = vmatpush.xpose.msra.mxu0 0.0
    %291 = vmatpush.xpose.msra.mxu0 0.0
    %292 = vmatpush.xpose.msra.mxu0 0.0
    %293 = vmatpush.xpose.msra.mxu0 0.0
    %294 = vmatpush.xpose.msra.mxu0 0.0
    %295 = vmatpush.xpose.msra.mxu0 0.0
    %296 = vmatpush.xpose.msra.mxu0 0.0
    %297 = vmatpush.xpose.msra.mxu0 0.0
    %298 = vmatpush.xpose.msra.mxu0 0.0
    %299 = vmatpush.xpose.msra.mxu0 0.0
    %300 = vmatpush.xpose.msra.mxu0 0.0
    %301 = vmatpush.xpose.msra.mxu0 0.0
    %302 = vmatpush.xpose.msra.mxu0 %v285
    %303 = vmatmul.f32.gmra.mxu0 %v283
    %v304 = vpop.f32.mrf.mxu0
    %v305 = vadd.f32 0.0, %v304
    %306 = vdwg.mxu0
    %v307 = vmul.f32 %v278, 0.05103104
    %v308 = vmul.f32 %v305, 0.05103104
    %v309 = vlaneseq
    %v310 = vshrl.u32 %v309, 7
    %v311 = vlaneseq
    %v312 = vand.u32 %v311, 127
    %vm313 = vcmp.le.s32.totalorder %v312, %v310
    %v314 = vsel %vm313, 1, 0
    %vm315 = vcmp.eq.s32.totalorder %v314, 1
    %v316 = vsel %vm315, %v307, -inf
    %v317 = vsel %vm315, %v308, -inf
    %vm318 = vcmask 64512
    %v319 = vsel %vm318, %v316, -inf
    %320 = vmax.xlane.f32.xlu0 %v319
    %v321 = vpop.xlane.xlu0 %320
    %v322 = vsel %vm318, %v317, -inf
    %323 = vmax.xlane.f32.xlu0 %v322
    %v324 = vpop.xlane.xlu0 %323
    %v325 = vsub.f32 %v316, %v321
    %v326 = vsub.f32 %v317, %v324
    %v327 = vmul.f32 %v325, 1.442695
    %v328 = vpow.pop %v327
    %v329 = vmul.f32 %v326, 1.442695
    %v330 = vpow.pop %v329
    %v331 = vsel %vm318, %v328, 0.0
    %332 = vadd.xlane.f32.xlu0 %v331
    %v333 = vpop.xlane.xlu0 %332
    %v334 = vsel %vm318, %v330, 0.0
    %335 = vadd.xlane.f32.xlu0 %v334
    %v336 = vpop.xlane.xlu0 %335
    %v337 = vrcp.pop %v333
    %v338 = vmul.f32 %v333, %v337
    %v339 = vsub.f32 1.0, %v338
    %v340 = vmul.f32 %v337, %v339
    %v341 = vadd.f32 %v337, %v340
    %vm342 = vweird.f32 %v333
    %vm343 = vweird.f32 %v337
    %vm344 = vmor %vm342, %vm343
    %v345 = vsel %vm344, %v337, %v341
    %v346 = vand.u32 2147483647, %v333
    %vm347 = vcmp.eq.f32.partialorder %v346, 8.507059e+37
    %v348 = vand.u32 %v333, 2147483648
    %v349 = vor.u32 1.1754944e-38, %v348
    %v350 = vsel %vm347, %v349, %v345
    %v351 = vmul.f32 %v328, %v350
    %v352 = vrcp.pop %v336
    %v353 = vmul.f32 %v336, %v352
    %v354 = vsub.f32 1.0, %v353
    %v355 = vmul.f32 %v352, %v354
    %v356 = vadd.f32 %v352, %v355
    %vm357 = vweird.f32 %v336
    %vm358 = vweird.f32 %v352
    %vm359 = vmor %vm357, %vm358
    %v360 = vsel %vm359, %v352, %v356
    %v361 = vand.u32 2147483647, %v336
    %vm362 = vcmp.eq.f32.partialorder %v361, 8.507059e+37
    %v363 = vand.u32 %v336, 2147483648
    %v364 = vor.u32 1.1754944e-38, %v363
    %v365 = vsel %vm362, %v364, %v360
    %v366 = vmul.f32 %v330, %v365
    %v368 = vsel %vm318, %v351, 0
    %370 = vmatpush.msra.mxu0 0.0
    %371 = vmatpush.msra.mxu0 0.0
    %372 = vmatpush.msra.mxu0 0.0
    %373 = vmatpush.msra.mxu0 0.0
    %374 = vmatpush.msra.mxu0 0.0
    %375 = vmatpush.msra.mxu0 0.0
    %376 = vmatpush.msra.mxu0 0.0
    %377 = vmatpush.msra.mxu0 0.0
    %378 = vmatpush.msra.mxu0 0.0
    %379 = vmatpush.msra.mxu0 0.0
    %380 = vmatpush.msra.mxu0 0.0
    %381 = vmatpush.msra.mxu0 0.0
    %382 = vmatpush.msra.mxu0 0.0
    %383 = vmatpush.msra.mxu0 0.0
    %384 = vmatpush.msra.mxu0 0.0
    %385 = vmatpush.msra.mxu0 %v247
    %386 = vmatmul.f32.gmra.mxu0 %v368
    %v387 = vpop.f32.mrf.mxu0
    %v388 = vadd.f32 0.0, %v387
    %389 = vdwg.mxu0
    %v391 = vsel %vm318, %v366, 0
    %393 = vmatpush.msra.mxu0 0.0
    %394 = vmatpush.msra.mxu0 0.0
    %395 = vmatpush.msra.mxu0 0.0
    %396 = vmatpush.msra.mxu0 0.0
    %397 = vmatpush.msra.mxu0 0.0
    %398 = vmatpush.msra.mxu0 0.0
    %399 = vmatpush.msra.mxu0 0.0
    %400 = vmatpush.msra.mxu0 0.0
    %401 = vmatpush.msra.mxu0 0.0
    %402 = vmatpush.msra.mxu0 0.0
    %403 = vmatpush.msra.mxu0 0.0
    %404 = vmatpush.msra.mxu0 0.0
    %405 = vmatpush.msra.mxu0 0.0
    %406 = vmatpush.msra.mxu0 0.0
    %407 = vmatpush.msra.mxu0 0.0
    %408 = vmatpush.msra.mxu0 %v250
    %409 = vmatmul.f32.gmra.mxu0 %v391
    %v410 = vpop.f32.mrf.mxu0
    %v411 = vadd.f32 0.0, %v410
    %412 = vdwg.mxu0
    %413 = vst.msk [vmem:[#allocation2] sm:$0xff] %vm255, %v388
    %414 = vst.msk [vmem:[#allocation2 + $0x8] sm:$0xff] %vm255, %v411
    // Predicated region
    $region10: #{tpu_custom_call.1} parent=1 // pred_check
      _
    $region11: #{tpu_custom_call.1} parent=1 // pred_check_branch
      %416 = sbr.rel (0) target = $region13
    $region12: #{tpu_custom_call.1} parent=1 // pred_region
      %418 = vsyncadd [#allocation3], 0
      %s419 = sshll.u32 [#allocation2], 4
      %s420 = int_to_ptr.vmem [resolvable:$true] %s419
      %s421 = sshll.u32 %s2, 4
      %s422 = int_to_ptr.hbm [resolvable:$true] %s421
      %427 = dma.vmem_to_hbm [thread:$0]  %s420, 256, %s422, [#allocation3], 128, 128, 8
    $region13: #{tpu_custom_call.1} parent=1 // pred_fallthru
      _
    // Predicated region
    $region14: #{tpu_custom_call.1} parent=1 // pred_check
      _
    $region15: #{tpu_custom_call.1} parent=1 // pred_check_branch
      %429 = sbr.rel (0) target = $region17
    $region16: #{tpu_custom_call.1} parent=1 // pred_region
      %431 = dma.done [#allocation3], 256
    $region17: #{tpu_custom_call.1} parent=1 // pred_fallthru
      _
    %432 = vsyncpa [#allocation3], 1

</llo_original>
